<compile_context>
chip_gen: v5e
topology: v5e:2x2
jax: 0.10.0
libtpu: 0.0.40
codegen_flags: <defaults>
</compile_context>

<pallas_src>
import numpy as np
import jax
import jax.numpy as jnp
from jax.experimental import pallas as pl
from jax.experimental.pallas import tpu as pltpu

_INV_SQRT2 = float(1.0 / np.sqrt(2.0))   # db1 / Haar coefficient


# ----------------------------------------------------------------------------
# Pallas kernel: 2K accumulating dots over shifted polyphase taps + bias.
# ----------------------------------------------------------------------------
def _make_kernel(T, K):
    def kernel(e_ref, o_ref, a_ref, b_ref, out_ref):
        # e_ref, o_ref : (C, T + K - 1)  zero-padded even/odd polyphase tile
        # a_ref        : (2K, 2*Cout, C) folded weights (resident, const index)
        # b_ref        : (2*Cout, 1)     folded bias
        # out_ref      : (2*Cout, T)     rows [0:Cout] = even phase, rest odd
        acc = jnp.dot(a_ref[0], e_ref[:, pl.ds(0, T)],
                      preferred_element_type=jnp.float32)
        for s in range(1, K):
            acc = acc + jnp.dot(a_ref[s], e_ref[:, pl.ds(s, T)],
                                preferred_element_type=jnp.float32)
        for s in range(K):
            acc = acc + jnp.dot(a_ref[K + s], o_ref[:, pl.ds(s, T)],
                                preferred_element_type=jnp.float32)
        out_ref[...] = acc + b_ref[...]
    return kernel


# ----------------------------------------------------------------------------
# Host-side (jit-traceable) fold of all weights / scales / Haar constants.
# ----------------------------------------------------------------------------
def _fold_params(params, mxu_dtype):
    base_w = jnp.asarray(params['base_w'], jnp.float32)   # (C, C, K)
    base_b = jnp.asarray(params['base_b'], jnp.float32)   # (C,)
    base_s = jnp.asarray(params['base_s'], jnp.float32)   # (C,)
    wt_w = jnp.asarray(params['wt_w'], jnp.float32)       # (2C, 2C, K)
    wt_s = jnp.asarray(params['wt_s'], jnp.float32)       # (2C,)
    pw_w = jnp.asarray(params['pw_w'], jnp.float32)       # (Cout, C)

    C, _, K = base_w.shape
    Cout = pw_w.shape[0]
    p = (K - 1) // 2
    a2 = 0.5   # analysis(1/sqrt2) * synthesis(1/sqrt2) Haar constants

    # Fold the _ScaleModule scales into the conv weights (row-wise).
    bw = base_s[:, None, None] * base_w
    w = wt_s[:, None, None] * wt_w
    # torch interleaved layout: out 2c=ll_c / 2c+1=h_c, in 2c=lo_c / 2c+1=hi_c
    w_ll_lo, w_ll_hi = w[0::2, 0::2, :], w[0::2, 1::2, :]
    w_h_lo, w_h_hi = w[1::2, 0::2, :], w[1::2, 1::2, :]

    m_lo, m_hi = w_ll_lo - w_h_lo, w_ll_hi - w_h_hi   # even samples: a*(ll - h)
    q_lo, q_hi = w_ll_lo + w_h_lo, w_ll_hi + w_h_hi   # odd  samples: a*(ll + h)

    # Shift-major (K, C, C) contribution matrices of e/o tap (shift s == wavelet
    # tap index k) to the even/odd depthwise outputs -- wavelet branch:
    d_e_even = a2 * jnp.transpose(m_lo + m_hi, (2, 0, 1))
    d_o_even = a2 * jnp.transpose(m_lo - m_hi, (2, 0, 1))
    d_e_odd = a2 * jnp.transpose(q_lo + q_hi, (2, 0, 1))
    d_o_odd = a2 * jnp.transpose(q_lo - q_hi, (2, 0, 1))

    # Base ('same' K-tap) branch, scattered into its polyphase tap shifts.
    for k in range(K):
        if (k - p) % 2 == 0:
            d_e_even = d_e_even.at[(k + p) // 2].add(bw[:, :, k])
            d_o_odd = d_o_odd.at[(k + p) // 2].add(bw[:, :, k])
        else:
            d_o_even = d_o_even.at[(k + p - 1) // 2].add(bw[:, :, k])
            d_e_odd = d_e_odd.at[(k + p + 1) // 2].add(bw[:, :, k])

    def compose(d):   # compose with the 1x1 pointwise conv: (K, C, C)->(K, Cout, C)
        return jnp.einsum('oc,kcd->kod', pw_w, d,
                          precision=jax.lax.Precision.HIGHEST)

    a_e = jnp.concatenate([compose(d_e_even), compose(d_e_odd)], axis=1)
    a_o = jnp.concatenate([compose(d_o_even), compose(d_o_odd)], axis=1)
    A = jnp.concatenate([a_e, a_o], axis=0).astype(mxu_dtype)   # (2K, 2Cout, C)

    bias = jnp.sum(pw_w * (base_s * base_b)[None, :], axis=1)   # (Cout,)
    bias = jnp.concatenate([bias, bias]).reshape(2 * Cout, 1).astype(jnp.float32)
    return A, bias


def _pick_lh_tile(Lh, C, Cout, in_itemsize):
    """Lane-dense Lh tile sized from a per-generation-safe VMEM budget."""
    if Lh <= 512:
        return Lh
    per_lane = (2 * 2 * C * in_itemsize      # double-buffered e/o input tiles
                + 2 * 2 * Cout * 4           # double-buffered f32 output tile
                + 2 * 2 * Cout * 4)          # accumulator temporaries
    budget = 12 * 1024 * 1024  # TODO(synk): halve for v7x (64 MiB physical VMEM)
    t = (budget // per_lane) // 128 * 128
    t = max(128, min(2048, t))
    return min(t, -(-Lh // 128) * 128)


# ----------------------------------------------------------------------------
# Wrapper
# ----------------------------------------------------------------------------
def dsconv_wtconv_forward(x, params, *, mxu_dtype=jnp.float32, tile_lh=None,
                          interleave_output=True):
    B, C, L = x.shape
    K = params['base_w'].shape[2]
    Cout = params['pw_w'].shape[0]
    assert L % 2 == 0, "wt_levels=1 path requires even L"
    assert K % 2 == 1, "'same' polyphase fold assumes odd kernel size"
    p = (K - 1) // 2
    Lh = L // 2

    A, bias = _fold_params(params, mxu_dtype)

    in_itemsize = jnp.dtype(mxu_dtype).itemsize
    T = _pick_lh_tile(Lh, C, Cout, in_itemsize) if tile_lh is None else int(tile_lh)
    NT = -(-Lh // T)
    Lh_pad = NT * T
    Tp = T + 2 * p

    # Layout plumbing (one fused XLA gather pass): even/odd polyphase split,
    # zero pad by p (+ tile remainder), overlapped (2p-halo) window extraction.
    pad = ((0, 0), (0, 0), (p, p + (Lh_pad - Lh)))
    xe = jnp.pad(x[:, :, 0::2], pad)
    xo = jnp.pad(x[:, :, 1::2], pad)
    win = (jnp.arange(NT) * T)[:, None] + jnp.arange(Tp)[None, :]   # (NT, Tp)
    e_tiles = jnp.transpose(xe[:, :, win], (0, 2, 1, 3)).astype(mxu_dtype)
    o_tiles = jnp.transpose(xo[:, :, win], (0, 2, 1, 3)).astype(mxu_dtype)

    # Explicit VMEM budget (double-buffered tiles + resident weights + temps).
    weight_bytes = A.size * in_itemsize + bias.size * 4
    est = (2 * (2 * C * Tp * in_itemsize)
           + 2 * (2 * Cout * T * 4)
           + 2 * weight_bytes
           + 4 * (2 * Cout * T * 4))
    vmem_limit = int(min(max(2 * est, 32 * 1024 * 1024), 48 * 1024 * 1024))

    out_tiles = pl.pallas_call(
        _make_kernel(T, K),
        out_shape=jax.ShapeDtypeStruct((B, NT, 2 * Cout, T), jnp.float32),
        grid=(B, NT),
        in_specs=[
            pl.BlockSpec((None, None, C, Tp), lambda b, j: (b, j, 0, 0)),
            pl.BlockSpec((None, None, C, Tp), lambda b, j: (b, j, 0, 0)),
            # Folded weights / bias: constant index maps -> fetched once.
            pl.BlockSpec((2 * K, 2 * Cout, C), lambda b, j: (0, 0, 0)),
            pl.BlockSpec((2 * Cout, 1), lambda b, j: (0, 0)),
        ],
        out_specs=pl.BlockSpec((None, None, 2 * Cout, T),
                               lambda b, j: (b, j, 0, 0)),
        compiler_params=pltpu.CompilerParams(
            dimension_semantics=("parallel", "parallel"),
            vmem_limit_bytes=vmem_limit),
    )(e_tiles, o_tiles, A, bias)

    y = out_tiles.reshape(B, NT, 2, Cout, T)
    if not interleave_output:
        ye = jnp.transpose(y[:, :, 0], (0, 2, 1, 3)).reshape(B, Cout, Lh_pad)
        yo = jnp.transpose(y[:, :, 1], (0, 2, 1, 3)).reshape(B, Cout, Lh_pad)
        return ye[:, :, :Lh], yo[:, :, :Lh]
    y = jnp.transpose(y, (0, 3, 1, 4, 2))             # (B, Cout, NT, T, 2)
    return y.reshape(B, Cout, 2 * Lh_pad)[:, :, :L]


# ----------------------------------------------------------------------------
# Parameter construction (mirrors module __init__ shapes / init values)
# ----------------------------------------------------------------------------
def make_params(key, C, Cout, K=3):
    k1, k2, k3, k4 = jax.random.split(key, 4)
    return dict(
        base_w=0.1 * jax.random.normal(k1, (C, C, K), dtype=jnp.float32),
        base_b=0.1 * jax.random.normal(k2, (C,), dtype=jnp.float32),
        base_s=jnp.ones((C,), jnp.float32),            # _ScaleModule init 1.0
        wt_w=0.1 * jax.random.normal(k3, (2 * C, 2 * C, K), dtype=jnp.float32),
        wt_s=0.1 * jnp.ones((2 * C,), jnp.float32),    # _ScaleModule init 0.1
        pw_w=0.1 * jax.random.normal(k4, (Cout, C), dtype=jnp.float32),
    )


# ----------------------------------------------------------------------------
# Pure-numpy reference of the PyTorch forward pass (for verification)
# ----------------------------------------------------------------------------
def ref_forward(x, params):
    a = _INV_SQRT2
    B, C, L = x.shape
    base_w = np.asarray(params['base_w'])
    K = base_w.shape[2]
    base_b = np.asarray(params['base_b'])
    base_s = np.asarray(params['base_s'])
    wt_w = np.asarray(params['wt_w'])
    wt_s = np.asarray(params['wt_s'])
    pw_w = np.asarray(params['pw_w'])

    def conv1d_same(z, w, bias=None):
        Bz, _, Lz = z.shape
        pad = (K - 1) // 2
        zp = np.pad(z, ((0, 0), (0, 0), (pad, K - 1 - pad)))
        out = np.zeros((Bz, w.shape[0], Lz), np.float32)
        for k in range(K):
            out += np.einsum('oc,bcl->bol', w[:, :, k], zp[:, :, k:k + Lz])
        if bias is not None:
            out += bias[None, :, None]
        return out

    # wavelet_transform_1d (db1, stride 2, pad 0)
    lo = a * (x[:, :, 0::2] + x[:, :, 1::2])
    hi = a * (x[:, :, 0::2] - x[:, :, 1::2])
    z = np.zeros((B, 2 * C, L // 2), np.float32)
    z[:, 0::2] = lo
    z[:, 1::2] = hi
    y = conv1d_same(z, wt_w) * wt_s[None, :, None]
    y_ll = y[:, 0::2]
    y_h = y[:, 1::2]
    # inverse_wavelet_transform_1d (conv_transpose1d, stride 2, pad 0)
    x_tag = np.zeros((B, C, L), np.float32)
    x_tag[:, :, 0::2] = a * (y_ll - y_h)
    x_tag[:, :, 1::2] = a * (y_ll + y_h)
    # base path + combine, then pointwise 1x1 conv
    base = conv1d_same(x, base_w, base_b) * base_s[None, :, None]
    xd = base + x_tag
    return np.einsum('oc,bcl->bol', pw_w, xd)


if __name__ == "__main__":
    fwd = jax.jit(dsconv_wtconv_forward,
                  static_argnames=("mxu_dtype", "tile_lh", "interleave_output"))
    key = jax.random.PRNGKey(0)

    # Case 1: module-default small shape, f32 MXU operands, single Lh tile.
    B, C, Cout, L = 2, 4, 8, 16
    kx, kp, key = jax.random.split(key, 3)
    x = jax.random.normal(kx, (B, C, L), dtype=jnp.float32)
    params = make_params(kp, C, Cout, K=3)
    out = jax.block_until_ready(fwd(x, params))
    ref = ref_forward(np.asarray(x), params)
    np.testing.assert_allclose(np.asarray(out), ref, rtol=5e-4, atol=5e-5)

    # Case 2: exercises the tiled-Lh (halo) path with B=1 and NT=2.
    B2, C2, Cout2, L2 = 1, 8, 8, 64
    kx2, kp2, key = jax.random.split(key, 3)
    x2 = jax.random.normal(kx2, (B2, C2, L2), dtype=jnp.float32)
    params2 = make_params(kp2, C2, Cout2, K=3)
    out2 = jax.block_until_ready(fwd(x2, params2, tile_lh=16))
    ref2 = ref_forward(np.asarray(x2), params2)
    np.testing.assert_allclose(np.asarray(out2), ref2, rtol=5e-4, atol=5e-5)

    # Case 3: bf16 MXU operands (perf path on v5e/v6e/v7x), f32 accumulation.
    out3 = jax.block_until_ready(fwd(x, params, mxu_dtype=jnp.bfloat16))
    np.testing.assert_allclose(np.asarray(out3), ref, rtol=2e-2, atol=2e-2)

    print("KERNEL_OK")
</pallas_src>

<mosaic_0001>
module attributes {stable_mosaic.version = 11 : i64} {
  func.func @kernel(%arg0: i32, %arg1: i32, %arg2: memref<1x1x4x10xf32, #tpu.memory_space<vmem>>, %arg3: memref<1x1x4x10xf32, #tpu.memory_space<vmem>>, %arg4: memref<6x16x4xf32, #tpu.memory_space<vmem>>, %arg5: memref<16x1xf32, #tpu.memory_space<vmem>>, %arg6: memref<1x1x16x8xf32, #tpu.memory_space<vmem>>) attributes {dimension_semantics = [#tpu.dimension_semantics<parallel>, #tpu.dimension_semantics<parallel>], iteration_bounds = array<i64: 2, 1>, scalar_prefetch = 0 : i64, scratch_operands = 0 : i64, tpu.core_type = #tpu.core_type<tc>, window_params = [{transform_indices = @transform_0, window_bounds = array<i64: 1, 1, 4, 10>}, {transform_indices = @transform_1, window_bounds = array<i64: 1, 1, 4, 10>}, {pipeline_mode = #tpu.pipeline_mode<synchronous>, transform_indices = @transform_2, window_bounds = array<i64: 6, 16, 4>}, {pipeline_mode = #tpu.pipeline_mode<synchronous>, transform_indices = @transform_3, window_bounds = array<i64: 16, 1>}, {transform_indices = @transform_4, window_bounds = array<i64: 1, 1, 16, 8>}]} {
    %c0 = arith.constant 0 : index
    %c0_0 = arith.constant 0 : index
    %c0_1 = arith.constant 0 : index
    %0 = vector.load %arg4[%c0, %c0_0, %c0_1] : memref<6x16x4xf32, #tpu.memory_space<vmem>>, vector<1x16x4xf32>
    %1 = vector.shape_cast %0 : vector<1x16x4xf32> to vector<16x4xf32>
    %c0_2 = arith.constant 0 : index
    %c0_3 = arith.constant 0 : index
    %c0_4 = arith.constant 0 : index
    %c0_5 = arith.constant 0 : index
    %2 = vector.load %arg2[%c0_2, %c0_3, %c0_4, %c0_5] : memref<1x1x4x10xf32, #tpu.memory_space<vmem>>, vector<1x1x4x8xf32>
    %3 = vector.shape_cast %2 : vector<1x1x4x8xf32> to vector<4x8xf32>
    %cst = arith.constant dense<0.000000e+00> : vector<16x8xf32>
    %4 = tpu.matmul %1, %3, %cst {dimension_numbers = #tpu.dot_dimension_numbers<[1], [0], [0], [1], [0, 0, 1, 1], [], []>} : vector<16x4xf32>, vector<4x8xf32>, vector<16x8xf32> -> vector<16x8xf32>
    %c1 = arith.constant 1 : index
    %c0_6 = arith.constant 0 : index
    %c0_7 = arith.constant 0 : index
    %5 = vector.load %arg4[%c1, %c0_6, %c0_7] : memref<6x16x4xf32, #tpu.memory_space<vmem>>, vector<1x16x4xf32>
    %6 = vector.shape_cast %5 : vector<1x16x4xf32> to vector<16x4xf32>
    %c0_8 = arith.constant 0 : index
    %c0_9 = arith.constant 0 : index
    %c0_10 = arith.constant 0 : index
    %c1_11 = arith.constant 1 : index
    %7 = vector.load %arg2[%c0_8, %c0_9, %c0_10, %c1_11] : memref<1x1x4x10xf32, #tpu.memory_space<vmem>>, vector<1x1x4x8xf32>
    %8 = vector.shape_cast %7 : vector<1x1x4x8xf32> to vector<4x8xf32>
    %cst_12 = arith.constant dense<0.000000e+00> : vector<16x8xf32>
    %9 = tpu.matmul %6, %8, %cst_12 {dimension_numbers = #tpu.dot_dimension_numbers<[1], [0], [0], [1], [0, 0, 1, 1], [], []>} : vector<16x4xf32>, vector<4x8xf32>, vector<16x8xf32> -> vector<16x8xf32>
    %10 = arith.addf %4, %9 : vector<16x8xf32>
    %c2 = arith.constant 2 : index
    %c0_13 = arith.constant 0 : index
    %c0_14 = arith.constant 0 : index
    %11 = vector.load %arg4[%c2, %c0_13, %c0_14] : memref<6x16x4xf32, #tpu.memory_space<vmem>>, vector<1x16x4xf32>
    %12 = vector.shape_cast %11 : vector<1x16x4xf32> to vector<16x4xf32>
    %c0_15 = arith.constant 0 : index
    %c0_16 = arith.constant 0 : index
    %c0_17 = arith.constant 0 : index
    %c2_18 = arith.constant 2 : index
    %13 = vector.load %arg2[%c0_15, %c0_16, %c0_17, %c2_18] : memref<1x1x4x10xf32, #tpu.memory_space<vmem>>, vector<1x1x4x8xf32>
    %14 = vector.shape_cast %13 : vector<1x1x4x8xf32> to vector<4x8xf32>
    %cst_19 = arith.constant dense<0.000000e+00> : vector<16x8xf32>
    %15 = tpu.matmul %12, %14, %cst_19 {dimension_numbers = #tpu.dot_dimension_numbers<[1], [0], [0], [1], [0, 0, 1, 1], [], []>} : vector<16x4xf32>, vector<4x8xf32>, vector<16x8xf32> -> vector<16x8xf32>
    %16 = arith.addf %10, %15 : vector<16x8xf32>
    %c3 = arith.constant 3 : index
    %c0_20 = arith.constant 0 : index
    %c0_21 = arith.constant 0 : index
    %17 = vector.load %arg4[%c3, %c0_20, %c0_21] : memref<6x16x4xf32, #tpu.memory_space<vmem>>, vector<1x16x4xf32>
    %18 = vector.shape_cast %17 : vector<1x16x4xf32> to vector<16x4xf32>
    %c0_22 = arith.constant 0 : index
    %c0_23 = arith.constant 0 : index
    %c0_24 = arith.constant 0 : index
    %c0_25 = arith.constant 0 : index
    %19 = vector.load %arg3[%c0_22, %c0_23, %c0_24, %c0_25] : memref<1x1x4x10xf32, #tpu.memory_space<vmem>>, vector<1x1x4x8xf32>
    %20 = vector.shape_cast %19 : vector<1x1x4x8xf32> to vector<4x8xf32>
    %cst_26 = arith.constant dense<0.000000e+00> : vector<16x8xf32>
    %21 = tpu.matmul %18, %20, %cst_26 {dimension_numbers = #tpu.dot_dimension_numbers<[1], [0], [0], [1], [0, 0, 1, 1], [], []>} : vector<16x4xf32>, vector<4x8xf32>, vector<16x8xf32> -> vector<16x8xf32>
    %22 = arith.addf %16, %21 : vector<16x8xf32>
    %c4 = arith.constant 4 : index
    %c0_27 = arith.constant 0 : index
    %c0_28 = arith.constant 0 : index
    %23 = vector.load %arg4[%c4, %c0_27, %c0_28] : memref<6x16x4xf32, #tpu.memory_space<vmem>>, vector<1x16x4xf32>
    %24 = vector.shape_cast %23 : vector<1x16x4xf32> to vector<16x4xf32>
    %c0_29 = arith.constant 0 : index
    %c0_30 = arith.constant 0 : index
    %c0_31 = arith.constant 0 : index
    %c1_32 = arith.constant 1 : index
    %25 = vector.load %arg3[%c0_29, %c0_30, %c0_31, %c1_32] : memref<1x1x4x10xf32, #tpu.memory_space<vmem>>, vector<1x1x4x8xf32>
    %26 = vector.shape_cast %25 : vector<1x1x4x8xf32> to vector<4x8xf32>
    %cst_33 = arith.constant dense<0.000000e+00> : vector<16x8xf32>
    %27 = tpu.matmul %24, %26, %cst_33 {dimension_numbers = #tpu.dot_dimension_numbers<[1], [0], [0], [1], [0, 0, 1, 1], [], []>} : vector<16x4xf32>, vector<4x8xf32>, vector<16x8xf32> -> vector<16x8xf32>
    %28 = arith.addf %22, %27 : vector<16x8xf32>
    %c5 = arith.constant 5 : index
    %c0_34 = arith.constant 0 : index
    %c0_35 = arith.constant 0 : index
    %29 = vector.load %arg4[%c5, %c0_34, %c0_35] : memref<6x16x4xf32, #tpu.memory_space<vmem>>, vector<1x16x4xf32>
    %30 = vector.shape_cast %29 : vector<1x16x4xf32> to vector<16x4xf32>
    %c0_36 = arith.constant 0 : index
    %c0_37 = arith.constant 0 : index
    %c0_38 = arith.constant 0 : index
    %c2_39 = arith.constant 2 : index
    %31 = vector.load %arg3[%c0_36, %c0_37, %c0_38, %c2_39] : memref<1x1x4x10xf32, #tpu.memory_space<vmem>>, vector<1x1x4x8xf32>
    %32 = vector.shape_cast %31 : vector<1x1x4x8xf32> to vector<4x8xf32>
    %cst_40 = arith.constant dense<0.000000e+00> : vector<16x8xf32>
    %33 = tpu.matmul %30, %32, %cst_40 {dimension_numbers = #tpu.dot_dimension_numbers<[1], [0], [0], [1], [0, 0, 1, 1], [], []>} : vector<16x4xf32>, vector<4x8xf32>, vector<16x8xf32> -> vector<16x8xf32>
    %34 = arith.addf %28, %33 : vector<16x8xf32>
    %c0_41 = arith.constant 0 : index
    %c0_42 = arith.constant 0 : index
    %35 = vector.load %arg5[%c0_41, %c0_42] : memref<16x1xf32, #tpu.memory_space<vmem>>, vector<16x1xf32>
    %36 = vector.broadcast %35 : vector<16x1xf32> to vector<16x8xf32>
    %37 = arith.addf %34, %36 : vector<16x8xf32>
    %c0_43 = arith.constant 0 : index
    %c0_44 = arith.constant 0 : index
    %c0_45 = arith.constant 0 : index
    %c0_46 = arith.constant 0 : index
    %38 = vector.load %arg6[%c0_43, %c0_44, %c0_45, %c0_46] : memref<1x1x16x8xf32, #tpu.memory_space<vmem>>, vector<1x1x16x8xf32>
    %39 = vector.shape_cast %38 : vector<1x1x16x8xf32> to vector<16x8xf32>
    %40 = vector.shape_cast %37 : vector<16x8xf32> to vector<1x1x16x8xf32>
    tpu.vector_store %arg6[%c0_43, %c0_44, %c0_45, %c0_46], %40 {strides = array<i32>} : memref<1x1x16x8xf32, #tpu.memory_space<vmem>>, vector<1x1x16x8xf32>,
    return
  }
  func.func @transform_0(%arg0: i32, %arg1: i32) -> (i32, i32, i32, i32) {
    %c0_i32 = arith.constant 0 : i32
    %c0_i32_0 = arith.constant 0 : i32
    %c0_i32_1 = arith.constant 0 : i32
    return %arg0, %arg1, %c0_i32, %c0_i32_0 : i32, i32, i32, i32
  }
  func.func @transform_1(%arg0: i32, %arg1: i32) -> (i32, i32, i32, i32) {
    %c0_i32 = arith.constant 0 : i32
    %c0_i32_0 = arith.constant 0 : i32
    %c0_i32_1 = arith.constant 0 : i32
    return %arg0, %arg1, %c0_i32, %c0_i32_0 : i32, i32, i32, i32
  }
  func.func @transform_2(%arg0: i32, %arg1: i32) -> (i32, i32, i32) {
    %c0_i32 = arith.constant 0 : i32
    %c0_i32_0 = arith.constant 0 : i32
    %c0_i32_1 = arith.constant 0 : i32
    %c0_i32_2 = arith.constant 0 : i32
    return %c0_i32, %c0_i32_0, %c0_i32_1 : i32, i32, i32
  }
  func.func @transform_3(%arg0: i32, %arg1: i32) -> (i32, i32) {
    %c0_i32 = arith.constant 0 : i32
    %c0_i32_0 = arith.constant 0 : i32
    %c0_i32_1 = arith.constant 0 : i32
    return %c0_i32, %c0_i32_0 : i32, i32
  }
  func.func @transform_4(%arg0: i32, %arg1: i32) -> (i32, i32, i32, i32) {
    %c0_i32 = arith.constant 0 : i32
    %c0_i32_0 = arith.constant 0 : i32
    %c0_i32_1 = arith.constant 0 : i32
    return %arg0, %arg1, %c0_i32, %c0_i32_0 : i32, i32, i32, i32
  }
}

</mosaic_0001>

<llo_original>
// kernel: mul.29
$region0: #{mul.29}
  #allocation4 [shape = 's32[1]{0}', space=sflag, size = 0x4, scoped, tag = 'scoped memory for mul.29']
  %s0 = inlined_call_operand.hbm [shape: f32[4], index: 0, kind: input, shape index: {}]
  %s1 = inlined_call_operand.hbm [shape: f32[4], index: 1, kind: input, shape index: {}]
  %s2 = inlined_call_operand.vmem [shape: f32[4], index: 2, kind: output, shape index: {}]
  $region1: #{mul.29} parent=0
    #allocation0 [shape = 'u8[512]{0}', space=vmem, size = 0x400, scoped, tag = 'operand span for operand 0']
    #allocation1 [shape = 's32[1]{0}', space=sflag, size = 0x4, scoped, tag = 'scoped memory for mul.29']
    #allocation2 [shape = 'u8[512]{0}', space=vmem, size = 0x400, scoped, tag = 'operand span for operand 1']
    #allocation3 [shape = 's32[1]{0}', space=sflag, size = 0x4, scoped, tag = 'scoped memory for mul.29']
    %3 = vsyncpa [#allocation1], 0
    %4 = vsyncpa [#allocation3], 0
    %6 = vsyncadd [#allocation1], 0
    %s8 = sshll.u32 %s0, 4
    %s9 = int_to_ptr.hbm [resolvable:$true] %s8
    %s10 = sshll.u32 [#allocation0], 4
    %s11 = int_to_ptr.vmem [resolvable:$true] %s10
    %13 = dma.hbm_to_vmem [thread:$0]  %s9, 16, %s11, [#allocation1]
    %15 = vsyncadd [#allocation3], 0
    %s17 = sshll.u32 %s1, 4
    %s18 = int_to_ptr.hbm [resolvable:$true] %s17
    %s19 = sshll.u32 [#allocation2], 4
    %s20 = int_to_ptr.vmem [resolvable:$true] %s19
    %22 = dma.hbm_to_vmem [thread:$0]  %s18, 16, %s20, [#allocation3]
    %24 = dma.done [#allocation1], 16
    %26 = dma.done [#allocation3], 16
    %v27 = vld [vmem:[#allocation0] sm:$0x1]
    %v28 = vld [vmem:[#allocation2] sm:$0x1]
    %29 = xla_tuple %v27, %v28
    %30 = xla_tuple %29
    %v31 = vmul.f32 %v27, %v28
    %32 = xla_tuple %v31
    %33 = vst [vmem:[%s2] sm:$0x1] %v31
    %34 = vsyncpa [#allocation1], 1
    %35 = vsyncpa [#allocation3], 1

// kernel: dsconv_wtconv_forward.1
$region0: #{dsconv_wtconv_forward.1}
  #allocation0 [shape = 'u32[]', space=smem, size = 0x4, offset = 0x4, fixed_abs, tag = 'smem constant byte address 0x4 - core index']
  #allocation1 [shape = 'u32[72,128]{1,0:T(1,128)}', space=vmem, size = 0x9000, scoped, tag = 'internal scratch']
  %s0 = inlined_call_operand.vmem [shape: f32[2,1,4,10], index: 0, kind: input, shape index: {}]
  %s1 = inlined_call_operand.vmem [shape: f32[2,1,4,10], index: 1, kind: input, shape index: {}]
  %s2 = inlined_call_operand.vmem [shape: f32[6,16,4], index: 2, kind: input, shape index: {}]
  %s3 = inlined_call_operand.vmem [shape: f32[16,1], index: 3, kind: input, shape index: {}]
  %s4 = inlined_call_operand.vmem [shape: f32[2,1,16,8], index: 4, kind: output, shape index: {}]
  %s5 = sld [smem:[#allocation0]]
  $region49: #{dsconv_wtconv_forward.1} parent=0
    _
  %s7 = ssub.s32 1, %s5
  %s8 = scalar_select 0, %s7, %s5
  loop: start=0, step=1, limit=4
  $region2: #{dsconv_wtconv_forward.1} parent=0 // loop_pre_header
    _
  $region3: #{dsconv_wtconv_forward.1} parent=0 // loop_header
    %s10 = sphi 0, %s14
    %p11 = scmp.ge.s32.totalorder %s10, 4
    %s17 = sphi 0, %s29
    %s18 = sphi 0, %s25
    %s19 = sphi 0, %s17
    %s20 = sphi 0, %s18
    %s21 = sphi 0, %s19
    %s22 = sphi 0, %s20
    %s34 = sphi 0, %s36
    %s37 = sphi 0, %s34
    %s38 = sphi 0, %s37
    %s54 = sphi 0, %s38
    %s62 = sphi 0, %s64
    %s65 = sphi 0, %s62
    %s66 = sphi 0, %s65
    %s82 = sphi 0, %s66
    %s86 = sphi 0, %s86
    %s88 = sphi 0, %s86
    %s89 = sphi 0, %s88
    %s103 = sphi 0, %s89
    %s107 = sphi 0, %s107
    %s109 = sphi 0, %s107
    %s110 = sphi 0, %s109
    %s124 = sphi 0, %s110
    %s132 = sphi 0, %s134
    %s135 = sphi 0, %s132
    %s136 = sphi 0, %s135
    %s152 = sphi 0, %s136
  $region4: #{dsconv_wtconv_forward.1} parent=0 // loop_header_branch
    %13 = sbr.rel (%p11) target = $region8
  $region5: #{dsconv_wtconv_forward.1} parent=0 // loop_body
    %s15 = ssub.s32 %s10, 1
    %s16 = ssub.s32 %s10, 2
    %s23 = sadd.s32 1, %s18
    %p24 = scmp.ge.s32.totalorder %s23, 1
    %s25 = scalar_select %p24, 0, %s23
    %s26 = sadd.s32 1, %s17
    %s27 = scalar_select %p24, %s26, %s17
    %p28 = scmp.ge.s32.totalorder %s27, 2
    %s29 = scalar_select %p28, 0, %s27
    %s30 = ssub.s32 %s17, %s29
    %s31 = ssub.s32 %s18, %s25
    %s32 = sor.u32 %s30, %s31
    %p33 = scmp.eq.s32.totalorder %s32, 0
    %s35 = sadd.s32 %s34, 1
    %s36 = scalar_select %p33, %s34, %s35
    %p39 = pneg %p33
    %p40 = scmp.eq.s32.totalorder %s10, 1
    %p41 = por %p39, %p40
    %p42 = scmp.ne.s32.totalorder %s34, %s37
    %p43 = scmp.eq.s32.totalorder %s10, 0
    %p44 = por %p42, %p43
    %p45 = scmp.ne.s32.totalorder %s34, %s37
    %p46 = scmp.eq.s32.totalorder %s15, 1
    %p47 = por %p45, %p46
    %p48 = scmp.ne.s32.totalorder %s37, %s38
    %p49 = scmp.eq.s32.totalorder %s15, 0
    %p50 = por %p48, %p49
    %p51 = scmp.ne.s32.totalorder %s37, %s38
    %p52 = scmp.eq.s32.totalorder %s16, 1
    %p53 = por %p51, %p52
    %p55 = scmp.ne.s32.totalorder %s38, %s54
    %p56 = scmp.eq.s32.totalorder %s16, 0
    %p57 = por %p55, %p56
    %s58 = ssub.s32 %s17, %s29
    %s59 = ssub.s32 %s18, %s25
    %s60 = sor.u32 %s58, %s59
    %p61 = scmp.eq.s32.totalorder %s60, 0
    %s63 = sadd.s32 %s62, 1
    %s64 = scalar_select %p61, %s62, %s63
    %p67 = pneg %p61
    %p68 = scmp.eq.s32.totalorder %s10, 1
    %p69 = por %p67, %p68
    %p70 = scmp.ne.s32.totalorder %s62, %s65
    %p71 = scmp.eq.s32.totalorder %s10, 0
    %p72 = por %p70, %p71
    %p73 = scmp.ne.s32.totalorder %s62, %s65
    %p74 = scmp.eq.s32.totalorder %s15, 1
    %p75 = por %p73, %p74
    %p76 = scmp.ne.s32.totalorder %s65, %s66
    %p77 = scmp.eq.s32.totalorder %s15, 0
    %p78 = por %p76, %p77
    %p79 = scmp.ne.s32.totalorder %s65, %s66
    %p80 = scmp.eq.s32.totalorder %s16, 1
    %p81 = por %p79, %p80
    %p83 = scmp.ne.s32.totalorder %s66, %s82
    %p84 = scmp.eq.s32.totalorder %s16, 0
    %p85 = por %p83, %p84
    %s87 = sadd.s32 %s86, 1
    %p90 = scmp.eq.s32.totalorder %s10, 1
    %p91 = scmp.ne.s32.totalorder %s86, %s88
    %p92 = scmp.eq.s32.totalorder %s10, 0
    %p93 = por %p91, %p92
    %p94 = scmp.ne.s32.totalorder %s86, %s88
    %p95 = scmp.eq.s32.totalorder %s15, 1
    %p96 = por %p94, %p95
    %p97 = scmp.ne.s32.totalorder %s88, %s89
    %p98 = scmp.eq.s32.totalorder %s15, 0
    %p99 = por %p97, %p98
    %p100 = scmp.ne.s32.totalorder %s88, %s89
    %p101 = scmp.eq.s32.totalorder %s16, 1
    %p102 = por %p100, %p101
    %p104 = scmp.ne.s32.totalorder %s89, %s103
    %p105 = scmp.eq.s32.totalorder %s16, 0
    %p106 = por %p104, %p105
    %s108 = sadd.s32 %s107, 1
    %p111 = scmp.eq.s32.totalorder %s10, 1
    %p112 = scmp.ne.s32.totalorder %s107, %s109
    %p113 = scmp.eq.s32.totalorder %s10, 0
    %p114 = por %p112, %p113
    %p115 = scmp.ne.s32.totalorder %s107, %s109
    %p116 = scmp.eq.s32.totalorder %s15, 1
    %p117 = por %p115, %p116
    %p118 = scmp.ne.s32.totalorder %s109, %s110
    %p119 = scmp.eq.s32.totalorder %s15, 0
    %p120 = por %p118, %p119
    %p121 = scmp.ne.s32.totalorder %s109, %s110
    %p122 = scmp.eq.s32.totalorder %s16, 1
    %p123 = por %p121, %p122
    %p125 = scmp.ne.s32.totalorder %s110, %s124
    %p126 = scmp.eq.s32.totalorder %s16, 0
    %p127 = por %p125, %p126
    %s128 = ssub.s32 %s17, %s29
    %s129 = ssub.s32 %s18, %s25
    %s130 = sor.u32 %s128, %s129
    %p131 = scmp.eq.s32.totalorder %s130, 0
    %s133 = sadd.s32 %s132, 1
    %s134 = scalar_select %p131, %s132, %s133
    %p137 = pneg %p131
    %p138 = scmp.eq.s32.totalorder %s10, 1
    %p139 = por %p137, %p138
    %p140 = scmp.ne.s32.totalorder %s132, %s135
    %p141 = scmp.eq.s32.totalorder %s10, 0
    %p142 = por %p140, %p141
    %p143 = scmp.ne.s32.totalorder %s132, %s135
    %p144 = scmp.eq.s32.totalorder %s15, 1
    %p145 = por %p143, %p144
    %p146 = scmp.ne.s32.totalorder %s135, %s136
    %p147 = scmp.eq.s32.totalorder %s15, 0
    %p148 = por %p146, %p147
    %p149 = scmp.ne.s32.totalorder %s135, %s136
    %p150 = scmp.eq.s32.totalorder %s16, 1
    %p151 = por %p149, %p150
    %p153 = scmp.ne.s32.totalorder %s136, %s152
    %p154 = scmp.eq.s32.totalorder %s16, 0
    %p155 = por %p153, %p154
    %p156 = scmp.le.s32.totalorder 1, %s10
    %p157 = scmp.lt.s32.totalorder %s10, 3
    %p158 = pnand %p156, %p157
    %p159 = pneg %p158
    // Predicated region
    $region9: #{dsconv_wtconv_forward.1} parent=5 // pred_check
      _
    $region10: #{dsconv_wtconv_forward.1} parent=5 // pred_check_branch
      %161 = sbr.rel (%p158) target = $region12
    $region11: #{dsconv_wtconv_forward.1} parent=5 // pred_region
      %s162 = ssub.s32 %s10, 1
      // Predicated region
      $region13: #{dsconv_wtconv_forward.1} parent=11 // pred_check
        %p163 = pneg %p99
      $region14: #{dsconv_wtconv_forward.1} parent=11 // pred_check_branch
        %165 = sbr.rel (%p163) target = $region16
      $region15: #{dsconv_wtconv_forward.1} parent=11 // pred_region
        _
      $region16: #{dsconv_wtconv_forward.1} parent=11 // pred_fallthru
        _
      // Predicated region
      $region17: #{dsconv_wtconv_forward.1} parent=11 // pred_check
        %p166 = pneg %p120
      $region18: #{dsconv_wtconv_forward.1} parent=11 // pred_check_branch
        %168 = sbr.rel (%p166) target = $region20
      $region19: #{dsconv_wtconv_forward.1} parent=11 // pred_region
        _
      $region20: #{dsconv_wtconv_forward.1} parent=11 // pred_fallthru
        _
    $region12: #{dsconv_wtconv_forward.1} parent=5 // pred_fallthru
      _
    %p169 = scmp.lt.s32.totalorder %s10, 2
    // Predicated region
    $region21: #{dsconv_wtconv_forward.1} parent=5 // pred_check
      %p170 = pneg %p169
    $region22: #{dsconv_wtconv_forward.1} parent=5 // pred_check_branch
      %172 = sbr.rel (%p170) target = $region24
    $region23: #{dsconv_wtconv_forward.1} parent=5 // pred_region
      // Predicated region
      $region25: #{dsconv_wtconv_forward.1} parent=23 // pred_check
        %p173 = pneg %p44
      $region26: #{dsconv_wtconv_forward.1} parent=23 // pred_check_branch
        %175 = sbr.rel (%p173) target = $region28
      $region27: #{dsconv_wtconv_forward.1} parent=23 // pred_region
        %p176 = scmp.lt.s32.totalorder %s17, 1
        %s177 = scalar_select %p176, %s17, 1
        %p178 = scmp.lt.s32.totalorder %s18, 0
        %s179 = scalar_select %p178, %s18, 0
        %s180 = sadd.s32 %s179, %s177
        %s181 = smul.addr %s180, 4
        %s182 = scalar_lea.vmem %s0, %s181
      $region28: #{dsconv_wtconv_forward.1} parent=23 // pred_fallthru
        _
      // Predicated region
      $region29: #{dsconv_wtconv_forward.1} parent=23 // pred_check
        %p183 = pneg %p72
      $region30: #{dsconv_wtconv_forward.1} parent=23 // pred_check_branch
        %185 = sbr.rel (%p183) target = $region32
      $region31: #{dsconv_wtconv_forward.1} parent=23 // pred_region
        %p186 = scmp.lt.s32.totalorder %s17, 1
        %s187 = scalar_select %p186, %s17, 1
        %p188 = scmp.lt.s32.totalorder %s18, 0
        %s189 = scalar_select %p188, %s18, 0
        %s190 = sadd.s32 %s189, %s187
        %s191 = smul.addr %s190, 4
        %s192 = scalar_lea.vmem %s1, %s191
      $region32: #{dsconv_wtconv_forward.1} parent=23 // pred_fallthru
        _
    $region24: #{dsconv_wtconv_forward.1} parent=5 // pred_fallthru
      _
    %p193 = scmp.le.s32.totalorder 1, %s10
    %p194 = scmp.lt.s32.totalorder %s10, 3
    %p195 = pnand %p193, %p194
    %p196 = pneg %p195
    // Predicated region
    $region33: #{dsconv_wtconv_forward.1} parent=5 // pred_check
      _
    $region34: #{dsconv_wtconv_forward.1} parent=5 // pred_check_branch
      %198 = sbr.rel (%p195) target = $region36
    $region35: #{dsconv_wtconv_forward.1} parent=5 // pred_region
      %s199 = ssub.s32 %s10, 1
      %p200 = scmp.lt.s32.totalorder %s19, 1
      %s201 = scalar_select %p200, %s19, 1
      %p202 = scmp.lt.s32.totalorder %s20, 0
      %s203 = scalar_select %p202, %s20, 0
      %s204 = sadd.s32 %s203, %s201
      %s205 = smul.addr %s204, 4
      %s206 = scalar_lea.vmem %s0, %s205
      %p207 = pneg %p50
      %p208 = pneg %p47
      %p209 = scmp.lt.s32.totalorder %s19, 1
      %s210 = scalar_select %p209, %s19, 1
      %p211 = scmp.lt.s32.totalorder %s20, 0
      %s212 = scalar_select %p211, %s20, 0
      %s213 = sadd.s32 %s212, %s210
      %s214 = smul.addr %s213, 4
      %s215 = scalar_lea.vmem %s1, %s214
      %p216 = pneg %p78
      %p217 = pneg %p75
      %p218 = pneg %p99
      %p219 = pneg %p96
      %p220 = pneg %p120
      %p221 = pneg %p117
      %p222 = pneg %p148
      %p223 = pneg %p145
      %p224 = scmp.lt.s32.totalorder %s19, 1
      %s225 = scalar_select %p224, %s19, 1
      %p226 = scmp.lt.s32.totalorder %s20, 0
      %s227 = scalar_select %p226, %s20, 0
      %s228 = smul.addr %s227, 2
      %s229 = smul.addr %s225, 2
      %s230 = sadd.s32 %s228, %s229
      %s231 = smul.addr %s230, 8
      %s232 = scalar_lea.vmem %s4, %s231
      %p233 = scmp.lt.s32.totalorder %s19, 1
      %s234 = scalar_select %p233, %s19, 1
      %p235 = scmp.lt.s32.totalorder %s20, 0
      %s236 = scalar_select %p235, %s20, 0
      %s237 = sadd.s32 %s236, %s234
      %s238 = smul.addr %s237, 4
      %s239 = scalar_lea.vmem %s0, %s238
      %p240 = scmp.lt.s32.totalorder %s19, 1
      %s241 = scalar_select %p240, %s19, 1
      %p242 = scmp.lt.s32.totalorder %s20, 0
      %s243 = scalar_select %p242, %s20, 0
      %s244 = sadd.s32 %s243, %s241
      %s245 = smul.addr %s244, 4
      %s246 = scalar_lea.vmem %s1, %s245
      %p247 = scmp.lt.s32.totalorder %s19, 1
      %s248 = scalar_select %p247, %s19, 1
      %p249 = scmp.lt.s32.totalorder %s20, 0
      %s250 = scalar_select %p249, %s20, 0
      %s251 = smul.addr %s250, 2
      %s252 = smul.addr %s248, 2
      %s253 = sadd.s32 %s251, %s252
      %s254 = smul.addr %s253, 8
      %s255 = scalar_lea.vmem %s4, %s254
      %v256 = vld [vmem:[%s2] sm:$0xff]
      %v257 = vld [vmem:[%s2 + $0x8] sm:$0xff]
      %v258 = vld [vmem:[%s239] sm:$0xf]
      %s259 = scalar_lea.vmem %s2, 16
      %v260 = vld [vmem:[%s259] sm:$0xff]
      %v261 = vld [vmem:[%s259 + $0x8] sm:$0xff]
      %263 = vrot.lane.b32.xlu0 %v258, 127
      %v264 = vpop.permute.xlu0 %263
      %vm265 = vcmask 31744
      %v267 = vsel %vm265, %v260, 0
      %v270 = vsel %vm265, %v261, 0
      %vm272 = vcmask 1043456
      %v273 = vsel %vm272, %v264, 0
      %275 = vmatpush.msra.mxu0 0.0
      %276 = vmatpush.msra.mxu0 0.0
      %277 = vmatpush.msra.mxu0 0.0
      %278 = vmatpush.msra.mxu0 0.0
      %279 = vmatpush.msra.mxu0 0.0
      %280 = vmatpush.msra.mxu0 0.0
      %281 = vmatpush.msra.mxu0 0.0
      %282 = vmatpush.msra.mxu0 0.0
      %283 = vmatpush.msra.mxu0 0.0
      %284 = vmatpush.msra.mxu0 0.0
      %285 = vmatpush.msra.mxu0 0.0
      %286 = vmatpush.msra.mxu0 0.0
      %287 = vmatpush.msra.mxu0 0.0
      %288 = vmatpush.msra.mxu0 0.0
      %289 = vmatpush.msra.mxu0 0.0
      %290 = vmatpush.msra.mxu0 %v273
      %291 = vmatmul.f32.gmra.mxu0 %v267
      %v292 = vpop.f32.mrf.mxu0
      %v293 = vadd.f32 0.0, %v292
      %294 = vmatmul.f32.gmra.mxu0 %v270
      %v295 = vpop.f32.mrf.mxu0
      %v296 = vadd.f32 0.0, %v295
      %297 = vdwg.mxu0
      %v299 = vsel %vm265, %v256, 0
      %v302 = vsel %vm265, %v257, 0
      %v304 = vsel %vm272, %v258, 0
      %306 = vmatpush.msra.mxu0 0.0
      %307 = vmatpush.msra.mxu0 0.0
      %308 = vmatpush.msra.mxu0 0.0
      %309 = vmatpush.msra.mxu0 0.0
      %310 = vmatpush.msra.mxu0 0.0
      %311 = vmatpush.msra.mxu0 0.0
      %312 = vmatpush.msra.mxu0 0.0
      %313 = vmatpush.msra.mxu0 0.0
      %314 = vmatpush.msra.mxu0 0.0
      %315 = vmatpush.msra.mxu0 0.0
      %316 = vmatpush.msra.mxu0 0.0
      %317 = vmatpush.msra.mxu0 0.0
      %318 = vmatpush.msra.mxu0 0.0
      %319 = vmatpush.msra.mxu0 0.0
      %320 = vmatpush.msra.mxu0 0.0
      %321 = vmatpush.msra.mxu0 %v304
      %322 = vmatmul.f32.gmra.mxu0 %v299
      %v323 = vpop.f32.mrf.mxu0
      %v324 = vadd.f32 %v293, %v323
      %325 = vmatmul.f32.gmra.mxu0 %v302
      %v326 = vpop.f32.mrf.mxu0
      %v327 = vadd.f32 %v296, %v326
      %328 = vdwg.mxu0
      %s329 = scalar_lea.vmem %s2, 32
      %v330 = vld [vmem:[%s329] sm:$0xff]
      %v331 = vld [vmem:[%s329 + $0x8] sm:$0xff]
      %332 = vrot.lane.b32.xlu0 %v258, 126
      %v333 = vpop.permute.xlu0 %332
      %v335 = vsel %vm265, %v330, 0
      %v338 = vsel %vm265, %v331, 0
      %v340 = vsel %vm272, %v333, 0
      %342 = vmatpush.msra.mxu0 0.0
      %343 = vmatpush.msra.mxu0 0.0
      %344 = vmatpush.msra.mxu0 0.0
      %345 = vmatpush.msra.mxu0 0.0
      %346 = vmatpush.msra.mxu0 0.0
      %347 = vmatpush.msra.mxu0 0.0
      %348 = vmatpush.msra.mxu0 0.0
      %349 = vmatpush.msra.mxu0 0.0
      %350 = vmatpush.msra.mxu0 0.0
      %351 = vmatpush.msra.mxu0 0.0
      %352 = vmatpush.msra.mxu0 0.0
      %353 = vmatpush.msra.mxu0 0.0
      %354 = vmatpush.msra.mxu0 0.0
      %355 = vmatpush.msra.mxu0 0.0
      %356 = vmatpush.msra.mxu0 0.0
      %357 = vmatpush.msra.mxu0 %v340
      %358 = vmatmul.f32.gmra.mxu0 %v335
      %v359 = vpop.f32.mrf.mxu0
      %v360 = vadd.f32 0.0, %v359
      %361 = vmatmul.f32.gmra.mxu0 %v338
      %v362 = vpop.f32.mrf.mxu0
      %v363 = vadd.f32 0.0, %v362
      %364 = vdwg.mxu0
      %v365 = vadd.f32 %v324, %v360
      %v366 = vadd.f32 %v327, %v363
      %s367 = scalar_lea.vmem %s2, 48
      %v368 = vld [vmem:[%s367] sm:$0xff]
      %v369 = vld [vmem:[%s367 + $0x8] sm:$0xff]
      %v370 = vld [vmem:[%s246] sm:$0xf]
      %v372 = vsel %vm265, %v368, 0
      %v375 = vsel %vm265, %v369, 0
      %v378 = vsel %vm272, %v370, 0
      %380 = vmatpush.msra.mxu0 0.0
      %381 = vmatpush.msra.mxu0 0.0
      %382 = vmatpush.msra.mxu0 0.0
      %383 = vmatpush.msra.mxu0 0.0
      %384 = vmatpush.msra.mxu0 0.0
      %385 = vmatpush.msra.mxu0 0.0
      %386 = vmatpush.msra.mxu0 0.0
      %387 = vmatpush.msra.mxu0 0.0
      %388 = vmatpush.msra.mxu0 0.0
      %389 = vmatpush.msra.mxu0 0.0
      %390 = vmatpush.msra.mxu0 0.0
      %391 = vmatpush.msra.mxu0 0.0
      %392 = vmatpush.msra.mxu0 0.0
      %393 = vmatpush.msra.mxu0 0.0
      %394 = vmatpush.msra.mxu0 0.0
      %395 = vmatpush.msra.mxu0 %v378
      %396 = vmatmul.f32.gmra.mxu0 %v372
      %v397 = vpop.f32.mrf.mxu0
      %v398 = vadd.f32 0.0, %v397
      %399 = vmatmul.f32.gmra.mxu0 %v375
      %v400 = vpop.f32.mrf.mxu0
      %v401 = vadd.f32 0.0, %v400
      %402 = vdwg.mxu0
      %v403 = vadd.f32 %v365, %v398
      %v404 = vadd.f32 %v366, %v401
      %s405 = scalar_lea.vmem %s2, 64
      %v406 = vld [vmem:[%s405] sm:$0xff]
      %v407 = vld [vmem:[%s405 + $0x8] sm:$0xff]
      %408 = vrot.lane.b32.xlu0 %v370, 127
      %v409 = vpop.permute.xlu0 %408
      %v411 = vsel %vm265, %v406, 0
      %v414 = vsel %vm265, %v407, 0
      %v416 = vsel %vm272, %v409, 0
      %418 = vmatpush.msra.mxu0 0.0
      %419 = vmatpush.msra.mxu0 0.0
      %420 = vmatpush.msra.mxu0 0.0
      %421 = vmatpush.msra.mxu0 0.0
      %422 = vmatpush.msra.mxu0 0.0
      %423 = vmatpush.msra.mxu0 0.0
      %424 = vmatpush.msra.mxu0 0.0
      %425 = vmatpush.msra.mxu0 0.0
      %426 = vmatpush.msra.mxu0 0.0
      %427 = vmatpush.msra.mxu0 0.0
      %428 = vmatpush.msra.mxu0 0.0
      %429 = vmatpush.msra.mxu0 0.0
      %430 = vmatpush.msra.mxu0 0.0
      %431 = vmatpush.msra.mxu0 0.0
      %432 = vmatpush.msra.mxu0 0.0
      %433 = vmatpush.msra.mxu0 %v416
      %434 = vmatmul.f32.gmra.mxu0 %v411
      %v435 = vpop.f32.mrf.mxu0
      %v436 = vadd.f32 0.0, %v435
      %437 = vmatmul.f32.gmra.mxu0 %v414
      %v438 = vpop.f32.mrf.mxu0
      %v439 = vadd.f32 0.0, %v438
      %440 = vdwg.mxu0
      %v441 = vadd.f32 %v403, %v436
      %v442 = vadd.f32 %v404, %v439
      %s443 = scalar_lea.vmem %s2, 80
      %v444 = vld [vmem:[%s443] sm:$0xff]
      %v445 = vld [vmem:[%s443 + $0x8] sm:$0xff]
      %446 = vrot.lane.b32.xlu0 %v370, 126
      %v447 = vpop.permute.xlu0 %446
      %v449 = vsel %vm265, %v444, 0
      %v452 = vsel %vm265, %v445, 0
      %v454 = vsel %vm272, %v447, 0
      %456 = vmatpush.msra.mxu0 0.0
      %457 = vmatpush.msra.mxu0 0.0
      %458 = vmatpush.msra.mxu0 0.0
      %459 = vmatpush.msra.mxu0 0.0
      %460 = vmatpush.msra.mxu0 0.0
      %461 = vmatpush.msra.mxu0 0.0
      %462 = vmatpush.msra.mxu0 0.0
      %463 = vmatpush.msra.mxu0 0.0
      %464 = vmatpush.msra.mxu0 0.0
      %465 = vmatpush.msra.mxu0 0.0
      %466 = vmatpush.msra.mxu0 0.0
      %467 = vmatpush.msra.mxu0 0.0
      %468 = vmatpush.msra.mxu0 0.0
      %469 = vmatpush.msra.mxu0 0.0
      %470 = vmatpush.msra.mxu0 0.0
      %471 = vmatpush.msra.mxu0 %v454
      %472 = vmatmul.f32.gmra.mxu0 %v449
      %v473 = vpop.f32.mrf.mxu0
      %v474 = vadd.f32 0.0, %v473
      %475 = vmatmul.f32.gmra.mxu0 %v452
      %v476 = vpop.f32.mrf.mxu0
      %v477 = vadd.f32 0.0, %v476
      %478 = vdwg.mxu0
      %v479 = vadd.f32 %v441, %v474
      %v480 = vadd.f32 %v442, %v477
      %v481 = vld [vmem:[%s3] sm:$0xff]
      %v482 = vld [vmem:[%s3 + $0x8] sm:$0xff]
      %484 = vset.pattern.permute.xlu0 0
      %485 = vperm.xlu0 %484, %v481
      %v486 = vpop.permute.xlu0 %485
      %489 = vset.pattern.permute.xlu0 0
      %490 = vperm.xlu0 %489, %v482
      %v491 = vpop.permute.xlu0 %490
      %v493 = vadd.f32 %v479, %v486
      %v494 = vadd.f32 %v480, %v491
      %vm495 = vcmask 64512
      %496 = vst.msk [vmem:[%s255] sm:$0xff] %vm495, %v493
      %497 = vst.msk [vmem:[%s255 + $0x8] sm:$0xff] %vm495, %v494
      %p498 = scmp.lt.s32.totalorder %s19, 1
      %s499 = scalar_select %p498, %s19, 1
      %p500 = scmp.lt.s32.totalorder %s20, 0
      %s501 = scalar_select %p500, %s20, 0
      %s502 = smul.addr %s501, 2
      %s503 = smul.addr %s499, 2
      %s504 = sadd.s32 %s502, %s503
      %s505 = smul.addr %s504, 8
      %s506 = scalar_lea.vmem %s4, %s505
      // Predicated region
      $region37: #{dsconv_wtconv_forward.1} parent=35 // pred_check
        %p507 = pneg %p145
      $region38: #{dsconv_wtconv_forward.1} parent=35 // pred_check_branch
        %509 = sbr.rel (%p507) target = $region40
      $region39: #{dsconv_wtconv_forward.1} parent=35 // pred_region
        _
      $region40: #{dsconv_wtconv_forward.1} parent=35 // pred_fallthru
        _
    $region36: #{dsconv_wtconv_forward.1} parent=5 // pred_fallthru
      _
    %p510 = scmp.le.s32.totalorder 2, %s10
    // Predicated region
    $region41: #{dsconv_wtconv_forward.1} parent=5 // pred_check
      %p511 = pneg %p510
    $region42: #{dsconv_wtconv_forward.1} parent=5 // pred_check_branch
      %513 = sbr.rel (%p511) target = $region44
    $region43: #{dsconv_wtconv_forward.1} parent=5 // pred_region
      %s514 = ssub.s32 %s10, 2
      // Predicated region
      $region45: #{dsconv_wtconv_forward.1} parent=43 // pred_check
        %p515 = pneg %p151
      $region46: #{dsconv_wtconv_forward.1} parent=43 // pred_check_branch
        %517 = sbr.rel (%p515) target = $region48
      $region47: #{dsconv_wtconv_forward.1} parent=43 // pred_region
        %p518 = scmp.lt.s32.totalorder %s21, 1
        %s519 = scalar_select %p518, %s21, 1
        %p520 = scmp.lt.s32.totalorder %s22, 0
        %s521 = scalar_select %p520, %s22, 0
        %s522 = smul.addr %s521, 2
        %s523 = smul.addr %s519, 2
        %s524 = sadd.s32 %s522, %s523
        %s525 = smul.addr %s524, 8
        %s526 = scalar_lea.vmem %s4, %s525
      $region48: #{dsconv_wtconv_forward.1} parent=43 // pred_fallthru
        _
    $region44: #{dsconv_wtconv_forward.1} parent=5 // pred_fallthru
      _
  $region6: #{dsconv_wtconv_forward.1} parent=0 // loop_footer
    %s14 = sadd.s32 1, %s10
  $region7: #{dsconv_wtconv_forward.1} parent=0 // loop_footer_branch
    %9 = sbr.rel target = $region3
  $region8: #{dsconv_wtconv_forward.1} parent=0 // loop_exit
    _

</llo_original>
